<compile_context>
chip_gen: v6e
topology: v6e:2x2x1
jax: 0.10.0
libtpu: 0.0.40
codegen_flags: <defaults>
</compile_context>

<pallas_src>
import numpy as np
import jax
import jax.numpy as jnp
from jax import lax
from jax.experimental import pallas as pl
from jax.experimental.pallas import tpu as pltpu


_LANE = 128                          # one vreg-wide feature sub-block
_MAX_TILE_BYTES = 2 * 1024 * 1024    # per-(tb, W) tile; x4 for 2 streams x 2 bufs
_MAX_FEATURE_LANES = 1024            # 4 KiB f32 row segments per DMA


def _roll_matches_jnp() -> bool:
    """True if pltpu.roll matches jnp.roll (positive shift moves data toward
    HIGHER lane indices).  Detected by eager evaluation; falls back to the
    documented jnp.roll convention if eager evaluation is unavailable."""
    try:
        probe = jnp.arange(8, dtype=jnp.int32).reshape(1, 8)
        rolled = np.asarray(pltpu.roll(probe, shift=1, axis=1))
        return int(rolled[0, 1]) == 0
    except Exception:
        return True


_ROLL_IS_JNP = _roll_matches_jnp()


def _flip_lanes_128(x, lane):
    """Reverse the last axis of `x` (exactly 128 lanes wide).

    log2(128) = 7 butterfly stages; stage `b` computes out[j] = in[j ^ b] from
    two static lane rotations (XLU) and one select (VPU).  The masks come from
    a hoisted int32 lane iota, so no extra XLU work per stage.
    """
    w = x.shape[-1]
    axis = x.ndim - 1                                  # pltpu.roll needs axis >= 0
    b = 1
    while b < w:
        plus = pltpu.roll(x, shift=w - b, axis=axis)   # carries in[(j + b) % w]
        minus = pltpu.roll(x, shift=b, axis=axis)      # carries in[(j - b) % w]
        if not _ROLL_IS_JNP:                           # opposite roll convention
            plus, minus = minus, plus
        bit_clear = (lane & b) == 0                    # there, j ^ b == j + b
        x = jnp.where(bit_clear, plus, minus)
        b *= 2
    return x


def _make_reverse_kernel(num_sub: int):
    """Kernel for one (tb, W) block, W = num_sub * 128.

    W-wide feature blocks already arrive in reversed order via the input
    index_map; here the 128-lane sub-blocks are re-ordered with static,
    lane-aligned slice copies and each sub-block's lanes are flipped.
    """
    def kernel(x_ref, o_ref):
        lane = lax.broadcasted_iota(jnp.int32, (1, _LANE), 1)   # hoisted once
        for k in range(num_sub):
            src = num_sub - 1 - k
            blk = x_ref[:, src * _LANE:(src + 1) * _LANE]
            o_ref[:, k * _LANE:(k + 1) * _LANE] = _flip_lanes_128(blk, lane)
    return kernel


def _sublane_multiple(itemsize: int) -> int:
    # f32 -> 8, bf16 -> 16, int8/fp8 -> 32 (sub-32-bit dtypes pack sublanes).
    return max(8, 32 // max(1, itemsize))


def _choose_feature_tile(n_pad: int) -> int:
    # Widest multiple of 128 lanes dividing the padded feature dim, capped at
    # 1024 lanes: large DMA row segments + fewer grid steps.
    w = min(n_pad, _MAX_FEATURE_LANES)
    w -= w % _LANE
    while n_pad % w:
        w -= _LANE
    return w


def _choose_batch_tile(b_pad: int, w: int, itemsize: int, sub_mult: int) -> int:
    # Keep one (tb, W) tile <= ~2 MiB so double-buffered in+out streams stay
    # <= ~8 MiB VMEM (safe under v5e's 16 MiB scoped default; v6e/v7x: 32 MiB).
    cap = _MAX_TILE_BYTES // (w * itemsize)
    cap = max(sub_mult, (cap // sub_mult) * sub_mult)
    return min(b_pad, cap)


def _reverse_features(x):
    """out[:, j] = x[:, n - 1 - j] for a 2-D (batch, features) array."""
    b, n = x.shape
    itemsize = x.dtype.itemsize
    sub_mult = _sublane_multiple(itemsize)

    # Pad batch at the bottom to a sublane-friendly multiple and features on
    # the LEFT to a multiple of 128: reversing the padded row puts the
    # reversed payload in columns [0, n) and the padding at the end.
    n_pad = pl.cdiv(n, _LANE) * _LANE
    b_pad = pl.cdiv(b, sub_mult) * sub_mult
    fpad, bpad = n_pad - n, b_pad - b
    xp = x if (fpad == 0 and bpad == 0) else jnp.pad(x, ((0, bpad), (fpad, 0)))

    w = _choose_feature_tile(n_pad)
    nf = n_pad // w
    tb = _choose_batch_tile(b_pad, w, itemsize, sub_mult)
    nb = pl.cdiv(b_pad, tb)

    out = pl.pallas_call(
        _make_reverse_kernel(w // _LANE),
        grid=(nb, nf),
        in_specs=[
            # Read W-wide feature blocks in reversed order ...
            pl.BlockSpec((tb, w), lambda i, j: (i, nf - 1 - j)),
        ],
        # ... and write them in natural order (lane-dense, unmasked stores).
        out_specs=pl.BlockSpec((tb, w), lambda i, j: (i, j)),
        out_shape=jax.ShapeDtypeStruct((b_pad, n_pad), x.dtype),
        compiler_params=pltpu.CompilerParams(
            # Pure data movement, no cross-block dependence: both grid axes
            # can be sharded across TensorCores (2x on v7x, neutral elsewhere).
            dimension_semantics=("parallel", "parallel")),
        cost_estimate=pl.CostEstimate(
            flops=0, transcendentals=0,
            bytes_accessed=2 * b_pad * n_pad * itemsize),
    )(xp)

    if fpad or bpad:
        out = out[:b, :n]
    return out


class ReversePallas:
    """Pallas TPU implementation of the RealNVP `Reverse` layer."""

    def __init__(self, num_inputs: int):
        self.num_inputs = num_inputs
        self.perm = np.array(np.arange(0, num_inputs)[::-1])
        self.inv_perm = np.argsort(self.perm)

    def __call__(self, x, mode: str = "forward", conditioned_on=None):
        assert x.ndim == 2 and x.shape[1] == self.num_inputs
        # For a full flip, perm == inv_perm, so forward and inverse are the
        # same kernel; `mode` / `conditioned_on` kept for PyTorch API parity.
        out = _reverse_features(x)
        # log|det J| of a permutation is exactly zero; produced in the wrapper
        # instead of paying for a (B, 1) masked-store output stream.
        logdet = jnp.zeros((x.shape[0],), dtype=jnp.float32)
        return out, logdet


if __name__ == "__main__":
    batch, num_inputs = 32, 256

    key = jax.random.PRNGKey(0)
    x = jax.random.normal(key, (batch, num_inputs), dtype=jnp.float32)

    layer = ReversePallas(num_inputs)

    # forward mode
    y, logdet = layer(x, mode="forward")
    y = jax.block_until_ready(y)
    logdet = jax.block_until_ready(logdet)

    ref = np.asarray(x)[:, layer.perm]
    assert y.shape == (batch, num_inputs)
    assert logdet.shape == (batch,)
    assert np.array_equal(np.asarray(y), ref), "forward mismatch"
    assert np.allclose(np.asarray(logdet), 0.0), "logdet mismatch"

    # inverse mode round-trips to the original input
    x_back, logdet_inv = layer(y, mode="inverse")
    x_back = jax.block_until_ready(x_back)
    assert np.array_equal(np.asarray(x_back), np.asarray(x)), "inverse mismatch"
    assert np.allclose(np.asarray(logdet_inv), 0.0), "inverse logdet mismatch"

    # ragged case: feature dim not a multiple of 128, batch not a multiple of 8
    b2, n2 = 30, 200
    x2 = jax.random.normal(jax.random.PRNGKey(1), (b2, n2), dtype=jnp.float32)
    layer2 = ReversePallas(n2)
    y2, ld2 = layer2(x2, mode="forward")
    y2 = jax.block_until_ready(y2)
    assert np.array_equal(np.asarray(y2), np.asarray(x2)[:, layer2.perm]), \
        "ragged forward mismatch"
    assert ld2.shape == (b2,)

    print("KERNEL_OK")
</pallas_src>

<mosaic_0001>
module attributes {stable_mosaic.version = 11 : i64} {
  func.func @kernel(%arg0: i32, %arg1: i32, %arg2: memref<32x256xf32, #tpu.memory_space<vmem>>, %arg3: memref<32x256xf32, #tpu.memory_space<vmem>>) attributes {dimension_semantics = [#tpu.dimension_semantics<parallel>, #tpu.dimension_semantics<parallel>], iteration_bounds = array<i64: 1, 1>, scalar_prefetch = 0 : i64, scratch_operands = 0 : i64, tpu.core_type = #tpu.core_type<tc>, window_params = [{transform_indices = @transform_0, window_bounds = array<i64: 32, 256>}, {transform_indices = @transform_1, window_bounds = array<i64: 32, 256>}]} {
    %0 = tpu.iota {dimensions = array<i32: 1>} : vector<1x128xi32>
    %c0 = arith.constant 0 : index
    %c128 = arith.constant 128 : index
    %1 = vector.load %arg2[%c0, %c128] : memref<32x256xf32, #tpu.memory_space<vmem>>, vector<32x128xf32>
    %c127_i32 = arith.constant 127 : i32
    %2 = tpu.dynamic_rotate %1 by %c127_i32 dim 1 : vector<32x128xf32>, i32 -> vector<32x128xf32>
    %c1_i32 = arith.constant 1 : i32
    %3 = tpu.dynamic_rotate %1 by %c1_i32 dim 1 : vector<32x128xf32>, i32 -> vector<32x128xf32>
    %c1_i32_0 = arith.constant 1 : i32
    %4 = vector.broadcast %c1_i32_0 : i32 to vector<1x128xi32>
    %5 = arith.andi %0, %4 : vector<1x128xi32>
    %c0_i32 = arith.constant 0 : i32
    %6 = vector.broadcast %c0_i32 : i32 to vector<1x128xi32>
    %7 = arith.cmpi eq, %5, %6 : vector<1x128xi32>
    %8 = vector.shape_cast %7 : vector<1x128xi1> to vector<1x128xi1>
    %9 = vector.broadcast %8 : vector<1x128xi1> to vector<32x128xi1>
    %10 = arith.select %9, %2, %3 : vector<32x128xi1>, vector<32x128xf32>
    %c126_i32 = arith.constant 126 : i32
    %11 = tpu.dynamic_rotate %10 by %c126_i32 dim 1 : vector<32x128xf32>, i32 -> vector<32x128xf32>
    %c2_i32 = arith.constant 2 : i32
    %12 = tpu.dynamic_rotate %10 by %c2_i32 dim 1 : vector<32x128xf32>, i32 -> vector<32x128xf32>
    %c2_i32_1 = arith.constant 2 : i32
    %13 = vector.broadcast %c2_i32_1 : i32 to vector<1x128xi32>
    %14 = arith.andi %0, %13 : vector<1x128xi32>
    %c0_i32_2 = arith.constant 0 : i32
    %15 = vector.broadcast %c0_i32_2 : i32 to vector<1x128xi32>
    %16 = arith.cmpi eq, %14, %15 : vector<1x128xi32>
    %17 = vector.shape_cast %16 : vector<1x128xi1> to vector<1x128xi1>
    %18 = vector.broadcast %17 : vector<1x128xi1> to vector<32x128xi1>
    %19 = arith.select %18, %11, %12 : vector<32x128xi1>, vector<32x128xf32>
    %c124_i32 = arith.constant 124 : i32
    %20 = tpu.dynamic_rotate %19 by %c124_i32 dim 1 : vector<32x128xf32>, i32 -> vector<32x128xf32>
    %c4_i32 = arith.constant 4 : i32
    %21 = tpu.dynamic_rotate %19 by %c4_i32 dim 1 : vector<32x128xf32>, i32 -> vector<32x128xf32>
    %c4_i32_3 = arith.constant 4 : i32
    %22 = vector.broadcast %c4_i32_3 : i32 to vector<1x128xi32>
    %23 = arith.andi %0, %22 : vector<1x128xi32>
    %c0_i32_4 = arith.constant 0 : i32
    %24 = vector.broadcast %c0_i32_4 : i32 to vector<1x128xi32>
    %25 = arith.cmpi eq, %23, %24 : vector<1x128xi32>
    %26 = vector.shape_cast %25 : vector<1x128xi1> to vector<1x128xi1>
    %27 = vector.broadcast %26 : vector<1x128xi1> to vector<32x128xi1>
    %28 = arith.select %27, %20, %21 : vector<32x128xi1>, vector<32x128xf32>
    %c120_i32 = arith.constant 120 : i32
    %29 = tpu.dynamic_rotate %28 by %c120_i32 dim 1 : vector<32x128xf32>, i32 -> vector<32x128xf32>
    %c8_i32 = arith.constant 8 : i32
    %30 = tpu.dynamic_rotate %28 by %c8_i32 dim 1 : vector<32x128xf32>, i32 -> vector<32x128xf32>
    %c8_i32_5 = arith.constant 8 : i32
    %31 = vector.broadcast %c8_i32_5 : i32 to vector<1x128xi32>
    %32 = arith.andi %0, %31 : vector<1x128xi32>
    %c0_i32_6 = arith.constant 0 : i32
    %33 = vector.broadcast %c0_i32_6 : i32 to vector<1x128xi32>
    %34 = arith.cmpi eq, %32, %33 : vector<1x128xi32>
    %35 = vector.shape_cast %34 : vector<1x128xi1> to vector<1x128xi1>
    %36 = vector.broadcast %35 : vector<1x128xi1> to vector<32x128xi1>
    %37 = arith.select %36, %29, %30 : vector<32x128xi1>, vector<32x128xf32>
    %c112_i32 = arith.constant 112 : i32
    %38 = tpu.dynamic_rotate %37 by %c112_i32 dim 1 : vector<32x128xf32>, i32 -> vector<32x128xf32>
    %c16_i32 = arith.constant 16 : i32
    %39 = tpu.dynamic_rotate %37 by %c16_i32 dim 1 : vector<32x128xf32>, i32 -> vector<32x128xf32>
    %c16_i32_7 = arith.constant 16 : i32
    %40 = vector.broadcast %c16_i32_7 : i32 to vector<1x128xi32>
    %41 = arith.andi %0, %40 : vector<1x128xi32>
    %c0_i32_8 = arith.constant 0 : i32
    %42 = vector.broadcast %c0_i32_8 : i32 to vector<1x128xi32>
    %43 = arith.cmpi eq, %41, %42 : vector<1x128xi32>
    %44 = vector.shape_cast %43 : vector<1x128xi1> to vector<1x128xi1>
    %45 = vector.broadcast %44 : vector<1x128xi1> to vector<32x128xi1>
    %46 = arith.select %45, %38, %39 : vector<32x128xi1>, vector<32x128xf32>
    %c96_i32 = arith.constant 96 : i32
    %47 = tpu.dynamic_rotate %46 by %c96_i32 dim 1 : vector<32x128xf32>, i32 -> vector<32x128xf32>
    %c32_i32 = arith.constant 32 : i32
    %48 = tpu.dynamic_rotate %46 by %c32_i32 dim 1 : vector<32x128xf32>, i32 -> vector<32x128xf32>
    %c32_i32_9 = arith.constant 32 : i32
    %49 = vector.broadcast %c32_i32_9 : i32 to vector<1x128xi32>
    %50 = arith.andi %0, %49 : vector<1x128xi32>
    %c0_i32_10 = arith.constant 0 : i32
    %51 = vector.broadcast %c0_i32_10 : i32 to vector<1x128xi32>
    %52 = arith.cmpi eq, %50, %51 : vector<1x128xi32>
    %53 = vector.shape_cast %52 : vector<1x128xi1> to vector<1x128xi1>
    %54 = vector.broadcast %53 : vector<1x128xi1> to vector<32x128xi1>
    %55 = arith.select %54, %47, %48 : vector<32x128xi1>, vector<32x128xf32>
    %c64_i32 = arith.constant 64 : i32
    %56 = tpu.dynamic_rotate %55 by %c64_i32 dim 1 : vector<32x128xf32>, i32 -> vector<32x128xf32>
    %c64_i32_11 = arith.constant 64 : i32
    %57 = tpu.dynamic_rotate %55 by %c64_i32_11 dim 1 : vector<32x128xf32>, i32 -> vector<32x128xf32>
    %c64_i32_12 = arith.constant 64 : i32
    %58 = vector.broadcast %c64_i32_12 : i32 to vector<1x128xi32>
    %59 = arith.andi %0, %58 : vector<1x128xi32>
    %c0_i32_13 = arith.constant 0 : i32
    %60 = vector.broadcast %c0_i32_13 : i32 to vector<1x128xi32>
    %61 = arith.cmpi eq, %59, %60 : vector<1x128xi32>
    %62 = vector.shape_cast %61 : vector<1x128xi1> to vector<1x128xi1>
    %63 = vector.broadcast %62 : vector<1x128xi1> to vector<32x128xi1>
    %64 = arith.select %63, %56, %57 : vector<32x128xi1>, vector<32x128xf32>
    %c0_14 = arith.constant 0 : index
    %c0_15 = arith.constant 0 : index
    %65 = vector.load %arg3[%c0_14, %c0_15] : memref<32x256xf32, #tpu.memory_space<vmem>>, vector<32x128xf32>
    tpu.vector_store %arg3[%c0_14, %c0_15], %64 {strides = array<i32>} : memref<32x256xf32, #tpu.memory_space<vmem>>, vector<32x128xf32>,
    %c0_16 = arith.constant 0 : index
    %c0_17 = arith.constant 0 : index
    %66 = vector.load %arg2[%c0_16, %c0_17] : memref<32x256xf32, #tpu.memory_space<vmem>>, vector<32x128xf32>
    %c127_i32_18 = arith.constant 127 : i32
    %67 = tpu.dynamic_rotate %66 by %c127_i32_18 dim 1 : vector<32x128xf32>, i32 -> vector<32x128xf32>
    %c1_i32_19 = arith.constant 1 : i32
    %68 = tpu.dynamic_rotate %66 by %c1_i32_19 dim 1 : vector<32x128xf32>, i32 -> vector<32x128xf32>
    %c1_i32_20 = arith.constant 1 : i32
    %69 = vector.broadcast %c1_i32_20 : i32 to vector<1x128xi32>
    %70 = arith.andi %0, %69 : vector<1x128xi32>
    %c0_i32_21 = arith.constant 0 : i32
    %71 = vector.broadcast %c0_i32_21 : i32 to vector<1x128xi32>
    %72 = arith.cmpi eq, %70, %71 : vector<1x128xi32>
    %73 = vector.shape_cast %72 : vector<1x128xi1> to vector<1x128xi1>
    %74 = vector.broadcast %73 : vector<1x128xi1> to vector<32x128xi1>
    %75 = arith.select %74, %67, %68 : vector<32x128xi1>, vector<32x128xf32>
    %c126_i32_22 = arith.constant 126 : i32
    %76 = tpu.dynamic_rotate %75 by %c126_i32_22 dim 1 : vector<32x128xf32>, i32 -> vector<32x128xf32>
    %c2_i32_23 = arith.constant 2 : i32
    %77 = tpu.dynamic_rotate %75 by %c2_i32_23 dim 1 : vector<32x128xf32>, i32 -> vector<32x128xf32>
    %c2_i32_24 = arith.constant 2 : i32
    %78 = vector.broadcast %c2_i32_24 : i32 to vector<1x128xi32>
    %79 = arith.andi %0, %78 : vector<1x128xi32>
    %c0_i32_25 = arith.constant 0 : i32
    %80 = vector.broadcast %c0_i32_25 : i32 to vector<1x128xi32>
    %81 = arith.cmpi eq, %79, %80 : vector<1x128xi32>
    %82 = vector.shape_cast %81 : vector<1x128xi1> to vector<1x128xi1>
    %83 = vector.broadcast %82 : vector<1x128xi1> to vector<32x128xi1>
    %84 = arith.select %83, %76, %77 : vector<32x128xi1>, vector<32x128xf32>
    %c124_i32_26 = arith.constant 124 : i32
    %85 = tpu.dynamic_rotate %84 by %c124_i32_26 dim 1 : vector<32x128xf32>, i32 -> vector<32x128xf32>
    %c4_i32_27 = arith.constant 4 : i32
    %86 = tpu.dynamic_rotate %84 by %c4_i32_27 dim 1 : vector<32x128xf32>, i32 -> vector<32x128xf32>
    %c4_i32_28 = arith.constant 4 : i32
    %87 = vector.broadcast %c4_i32_28 : i32 to vector<1x128xi32>
    %88 = arith.andi %0, %87 : vector<1x128xi32>
    %c0_i32_29 = arith.constant 0 : i32
    %89 = vector.broadcast %c0_i32_29 : i32 to vector<1x128xi32>
    %90 = arith.cmpi eq, %88, %89 : vector<1x128xi32>
    %91 = vector.shape_cast %90 : vector<1x128xi1> to vector<1x128xi1>
    %92 = vector.broadcast %91 : vector<1x128xi1> to vector<32x128xi1>
    %93 = arith.select %92, %85, %86 : vector<32x128xi1>, vector<32x128xf32>
    %c120_i32_30 = arith.constant 120 : i32
    %94 = tpu.dynamic_rotate %93 by %c120_i32_30 dim 1 : vector<32x128xf32>, i32 -> vector<32x128xf32>
    %c8_i32_31 = arith.constant 8 : i32
    %95 = tpu.dynamic_rotate %93 by %c8_i32_31 dim 1 : vector<32x128xf32>, i32 -> vector<32x128xf32>
    %c8_i32_32 = arith.constant 8 : i32
    %96 = vector.broadcast %c8_i32_32 : i32 to vector<1x128xi32>
    %97 = arith.andi %0, %96 : vector<1x128xi32>
    %c0_i32_33 = arith.constant 0 : i32
    %98 = vector.broadcast %c0_i32_33 : i32 to vector<1x128xi32>
    %99 = arith.cmpi eq, %97, %98 : vector<1x128xi32>
    %100 = vector.shape_cast %99 : vector<1x128xi1> to vector<1x128xi1>
    %101 = vector.broadcast %100 : vector<1x128xi1> to vector<32x128xi1>
    %102 = arith.select %101, %94, %95 : vector<32x128xi1>, vector<32x128xf32>
    %c112_i32_34 = arith.constant 112 : i32
    %103 = tpu.dynamic_rotate %102 by %c112_i32_34 dim 1 : vector<32x128xf32>, i32 -> vector<32x128xf32>
    %c16_i32_35 = arith.constant 16 : i32
    %104 = tpu.dynamic_rotate %102 by %c16_i32_35 dim 1 : vector<32x128xf32>, i32 -> vector<32x128xf32>
    %c16_i32_36 = arith.constant 16 : i32
    %105 = vector.broadcast %c16_i32_36 : i32 to vector<1x128xi32>
    %106 = arith.andi %0, %105 : vector<1x128xi32>
    %c0_i32_37 = arith.constant 0 : i32
    %107 = vector.broadcast %c0_i32_37 : i32 to vector<1x128xi32>
    %108 = arith.cmpi eq, %106, %107 : vector<1x128xi32>
    %109 = vector.shape_cast %108 : vector<1x128xi1> to vector<1x128xi1>
    %110 = vector.broadcast %109 : vector<1x128xi1> to vector<32x128xi1>
    %111 = arith.select %110, %103, %104 : vector<32x128xi1>, vector<32x128xf32>
    %c96_i32_38 = arith.constant 96 : i32
    %112 = tpu.dynamic_rotate %111 by %c96_i32_38 dim 1 : vector<32x128xf32>, i32 -> vector<32x128xf32>
    %c32_i32_39 = arith.constant 32 : i32
    %113 = tpu.dynamic_rotate %111 by %c32_i32_39 dim 1 : vector<32x128xf32>, i32 -> vector<32x128xf32>
    %c32_i32_40 = arith.constant 32 : i32
    %114 = vector.broadcast %c32_i32_40 : i32 to vector<1x128xi32>
    %115 = arith.andi %0, %114 : vector<1x128xi32>
    %c0_i32_41 = arith.constant 0 : i32
    %116 = vector.broadcast %c0_i32_41 : i32 to vector<1x128xi32>
    %117 = arith.cmpi eq, %115, %116 : vector<1x128xi32>
    %118 = vector.shape_cast %117 : vector<1x128xi1> to vector<1x128xi1>
    %119 = vector.broadcast %118 : vector<1x128xi1> to vector<32x128xi1>
    %120 = arith.select %119, %112, %113 : vector<32x128xi1>, vector<32x128xf32>
    %c64_i32_42 = arith.constant 64 : i32
    %121 = tpu.dynamic_rotate %120 by %c64_i32_42 dim 1 : vector<32x128xf32>, i32 -> vector<32x128xf32>
    %c64_i32_43 = arith.constant 64 : i32
    %122 = tpu.dynamic_rotate %120 by %c64_i32_43 dim 1 : vector<32x128xf32>, i32 -> vector<32x128xf32>
    %c64_i32_44 = arith.constant 64 : i32
    %123 = vector.broadcast %c64_i32_44 : i32 to vector<1x128xi32>
    %124 = arith.andi %0, %123 : vector<1x128xi32>
    %c0_i32_45 = arith.constant 0 : i32
    %125 = vector.broadcast %c0_i32_45 : i32 to vector<1x128xi32>
    %126 = arith.cmpi eq, %124, %125 : vector<1x128xi32>
    %127 = vector.shape_cast %126 : vector<1x128xi1> to vector<1x128xi1>
    %128 = vector.broadcast %127 : vector<1x128xi1> to vector<32x128xi1>
    %129 = arith.select %128, %121, %122 : vector<32x128xi1>, vector<32x128xf32>
    %c0_46 = arith.constant 0 : index
    %c128_47 = arith.constant 128 : index
    %130 = vector.load %arg3[%c0_46, %c128_47] : memref<32x256xf32, #tpu.memory_space<vmem>>, vector<32x128xf32>
    tpu.vector_store %arg3[%c0_46, %c128_47], %129 {strides = array<i32>} : memref<32x256xf32, #tpu.memory_space<vmem>>, vector<32x128xf32>,
    return
  }
  func.func @transform_0(%arg0: i32, %arg1: i32) -> (i32, i32) {
    %c0_i32 = arith.constant 0 : i32
    %0 = arith.subi %c0_i32, %arg1 : i32
    %c0_i32_0 = arith.constant 0 : i32
    return %arg0, %0 : i32, i32
  }
  func.func @transform_1(%arg0: i32, %arg1: i32) -> (i32, i32) {
    %c0_i32 = arith.constant 0 : i32
    return %arg0, %arg1 : i32, i32
  }
}

</mosaic_0001>

<llo_original>
// kernel: tpu_custom_call.1
$region0: #{tpu_custom_call.1}
  #allocation0 [shape = 'u32[]', space=smem, size = 0x4, offset = 0x4, fixed_abs, tag = 'smem constant byte address 0x4 - core index']
  #allocation1 [shape = 'u32[144,128]{1,0:T(1,128)}', space=vmem, size = 0x12000, scoped, tag = 'internal scratch']
  %s0 = inlined_call_operand.hbm [shape: f32[32,256], index: 0, kind: input, shape index: {}]
  %s1 = inlined_call_operand.hbm [shape: f32[32,256], index: 1, kind: output, shape index: {}]
  %s2 = sld [smem:[#allocation0]]
  $region18: #{tpu_custom_call.1} parent=0
    _
  %s4 = ssub.s32 1, %s2
  %s5 = scalar_select 0, %s4, %s2
  $region1: #{tpu_custom_call.1} parent=0
    #allocation2 [shape = 'u8[32768]{0}', space=vmem, size = 0x8000, scoped, tag = 'input window, operand 0, single buffered']
    #allocation3 [shape = 's32[1]{0}', space=sflag, size = 0x4, scoped, tag = 'scoped memory for tpu_custom_call.1']
    #allocation4 [shape = 's32[1]{0}', space=sflag, size = 0x4, scoped, tag = 'scoped memory for tpu_custom_call.1']
    #allocation5 [shape = 'u8[32768]{0}', space=vmem, size = 0x8000, scoped, tag = 'output window, operand 0, single buffered']
    %6 = vsyncpa [#allocation3], 0
    %7 = vsyncpa [#allocation4], 0
    // Predicated region
    $region2: #{tpu_custom_call.1} parent=1 // pred_check
      _
    $region3: #{tpu_custom_call.1} parent=1 // pred_check_branch
      %9 = sbr.rel (0) target = $region5
    $region4: #{tpu_custom_call.1} parent=1 // pred_region
      %s10 = ssub.s32 0, 0
      %s11 = smul.u32 2, %s10
      %s13 = ssub.s32 1024, 1024
      %14 = vsyncadd [#allocation3], %s13
      %s15 = smul.addr %s11, 128
      %s16 = scalar_lea.hbm %s0, %s15
      %s17 = sshll.u32 [#allocation2], 4
      %s18 = int_to_ptr.vmem [resolvable:$true] %s17
      %23 = dma.hbm_to_vmem [thread:$0]  %s16, 1024, %s18, [#allocation3], 256, 256, 16
    $region5: #{tpu_custom_call.1} parent=1 // pred_fallthru
      _
    // Predicated region
    $region6: #{tpu_custom_call.1} parent=1 // pred_check
      _
    $region7: #{tpu_custom_call.1} parent=1 // pred_check_branch
      %25 = sbr.rel (0) target = $region9
    $region8: #{tpu_custom_call.1} parent=1 // pred_region
      %26 = dma.done [#allocation3], 1024
    $region9: #{tpu_custom_call.1} parent=1 // pred_fallthru
      _
    %s27 = ssub.s32 0, 0
    %s28 = smul.u32 2, %s27
    %v29 = vlaneseq
    %v30 = vand.u32 %v29, 127
    %v31 = vld [vmem:[#allocation2 + $0x8] sm:$0xff]
    %v32 = vld [vmem:[#allocation2 + $0x18] sm:$0xff]
    %v33 = vld [vmem:[#allocation2 + $0x28] sm:$0xff]
    %v34 = vld [vmem:[#allocation2 + $0x38] sm:$0xff]
    %35 = vrot.lane.b32.xlu0 %v31, 127
    %v36 = vpop.permute.xlu0 %35
    %37 = vrot.lane.b32.xlu0 %v32, 127
    %v38 = vpop.permute.xlu0 %37
    %39 = vrot.lane.b32.xlu0 %v33, 127
    %v40 = vpop.permute.xlu0 %39
    %41 = vrot.lane.b32.xlu0 %v34, 127
    %v42 = vpop.permute.xlu0 %41
    %43 = vrot.lane.b32.xlu0 %v31, 1
    %v44 = vpop.permute.xlu0 %43
    %45 = vrot.lane.b32.xlu0 %v32, 1
    %v46 = vpop.permute.xlu0 %45
    %47 = vrot.lane.b32.xlu0 %v33, 1
    %v48 = vpop.permute.xlu0 %47
    %49 = vrot.lane.b32.xlu0 %v34, 1
    %v50 = vpop.permute.xlu0 %49
    %v51 = vand.u32 %v30, 1
    %vm52 = vcmp.eq.s32.totalorder %v51, 0
    %v53 = vsel %vm52, 1, 0
    %vm54 = vcmp.eq.s32.totalorder %v53, 1
    %v55 = vsel %vm54, %v36, %v44
    %v56 = vsel %vm54, %v38, %v46
    %v57 = vsel %vm54, %v40, %v48
    %v58 = vsel %vm54, %v42, %v50
    %59 = vrot.lane.b32.xlu0 %v55, 126
    %v60 = vpop.permute.xlu0 %59
    %61 = vrot.lane.b32.xlu0 %v56, 126
    %v62 = vpop.permute.xlu0 %61
    %63 = vrot.lane.b32.xlu0 %v57, 126
    %v64 = vpop.permute.xlu0 %63
    %65 = vrot.lane.b32.xlu0 %v58, 126
    %v66 = vpop.permute.xlu0 %65
    %67 = vrot.lane.b32.xlu0 %v55, 2
    %v68 = vpop.permute.xlu0 %67
    %69 = vrot.lane.b32.xlu0 %v56, 2
    %v70 = vpop.permute.xlu0 %69
    %71 = vrot.lane.b32.xlu0 %v57, 2
    %v72 = vpop.permute.xlu0 %71
    %73 = vrot.lane.b32.xlu0 %v58, 2
    %v74 = vpop.permute.xlu0 %73
    %v75 = vand.u32 %v30, 2
    %vm76 = vcmp.eq.s32.totalorder %v75, 0
    %v77 = vsel %vm76, 1, 0
    %vm78 = vcmp.eq.s32.totalorder %v77, 1
    %v79 = vsel %vm78, %v60, %v68
    %v80 = vsel %vm78, %v62, %v70
    %v81 = vsel %vm78, %v64, %v72
    %v82 = vsel %vm78, %v66, %v74
    %83 = vrot.lane.b32.xlu0 %v79, 124
    %v84 = vpop.permute.xlu0 %83
    %85 = vrot.lane.b32.xlu0 %v80, 124
    %v86 = vpop.permute.xlu0 %85
    %87 = vrot.lane.b32.xlu0 %v81, 124
    %v88 = vpop.permute.xlu0 %87
    %89 = vrot.lane.b32.xlu0 %v82, 124
    %v90 = vpop.permute.xlu0 %89
    %91 = vrot.lane.b32.xlu0 %v79, 4
    %v92 = vpop.permute.xlu0 %91
    %93 = vrot.lane.b32.xlu0 %v80, 4
    %v94 = vpop.permute.xlu0 %93
    %95 = vrot.lane.b32.xlu0 %v81, 4
    %v96 = vpop.permute.xlu0 %95
    %97 = vrot.lane.b32.xlu0 %v82, 4
    %v98 = vpop.permute.xlu0 %97
    %v99 = vand.u32 %v30, 4
    %vm100 = vcmp.eq.s32.totalorder %v99, 0
    %v101 = vsel %vm100, 1, 0
    %vm102 = vcmp.eq.s32.totalorder %v101, 1
    %v103 = vsel %vm102, %v84, %v92
    %v104 = vsel %vm102, %v86, %v94
    %v105 = vsel %vm102, %v88, %v96
    %v106 = vsel %vm102, %v90, %v98
    %107 = vrot.lane.b32.xlu0 %v103, 120
    %v108 = vpop.permute.xlu0 %107
    %109 = vrot.lane.b32.xlu0 %v104, 120
    %v110 = vpop.permute.xlu0 %109
    %111 = vrot.lane.b32.xlu0 %v105, 120
    %v112 = vpop.permute.xlu0 %111
    %113 = vrot.lane.b32.xlu0 %v106, 120
    %v114 = vpop.permute.xlu0 %113
    %115 = vrot.lane.b32.xlu0 %v103, 8
    %v116 = vpop.permute.xlu0 %115
    %117 = vrot.lane.b32.xlu0 %v104, 8
    %v118 = vpop.permute.xlu0 %117
    %119 = vrot.lane.b32.xlu0 %v105, 8
    %v120 = vpop.permute.xlu0 %119
    %121 = vrot.lane.b32.xlu0 %v106, 8
    %v122 = vpop.permute.xlu0 %121
    %v123 = vand.u32 %v30, 8
    %vm124 = vcmp.eq.s32.totalorder %v123, 0
    %v125 = vsel %vm124, 1, 0
    %vm126 = vcmp.eq.s32.totalorder %v125, 1
    %v127 = vsel %vm126, %v108, %v116
    %v128 = vsel %vm126, %v110, %v118
    %v129 = vsel %vm126, %v112, %v120
    %v130 = vsel %vm126, %v114, %v122
    %131 = vrot.lane.b32.xlu0 %v127, 112
    %v132 = vpop.permute.xlu0 %131
    %133 = vrot.lane.b32.xlu0 %v128, 112
    %v134 = vpop.permute.xlu0 %133
    %135 = vrot.lane.b32.xlu0 %v129, 112
    %v136 = vpop.permute.xlu0 %135
    %137 = vrot.lane.b32.xlu0 %v130, 112
    %v138 = vpop.permute.xlu0 %137
    %139 = vrot.lane.b32.xlu0 %v127, 16
    %v140 = vpop.permute.xlu0 %139
    %141 = vrot.lane.b32.xlu0 %v128, 16
    %v142 = vpop.permute.xlu0 %141
    %143 = vrot.lane.b32.xlu0 %v129, 16
    %v144 = vpop.permute.xlu0 %143
    %145 = vrot.lane.b32.xlu0 %v130, 16
    %v146 = vpop.permute.xlu0 %145
    %v147 = vand.u32 %v30, 16
    %vm148 = vcmp.eq.s32.totalorder %v147, 0
    %v149 = vsel %vm148, 1, 0
    %vm150 = vcmp.eq.s32.totalorder %v149, 1
    %v151 = vsel %vm150, %v132, %v140
    %v152 = vsel %vm150, %v134, %v142
    %v153 = vsel %vm150, %v136, %v144
    %v154 = vsel %vm150, %v138, %v146
    %155 = vrot.lane.b32.xlu0 %v151, 96
    %v156 = vpop.permute.xlu0 %155
    %157 = vrot.lane.b32.xlu0 %v152, 96
    %v158 = vpop.permute.xlu0 %157
    %159 = vrot.lane.b32.xlu0 %v153, 96
    %v160 = vpop.permute.xlu0 %159
    %161 = vrot.lane.b32.xlu0 %v154, 96
    %v162 = vpop.permute.xlu0 %161
    %163 = vrot.lane.b32.xlu0 %v151, 32
    %v164 = vpop.permute.xlu0 %163
    %165 = vrot.lane.b32.xlu0 %v152, 32
    %v166 = vpop.permute.xlu0 %165
    %167 = vrot.lane.b32.xlu0 %v153, 32
    %v168 = vpop.permute.xlu0 %167
    %169 = vrot.lane.b32.xlu0 %v154, 32
    %v170 = vpop.permute.xlu0 %169
    %v171 = vand.u32 %v30, 32
    %vm172 = vcmp.eq.s32.totalorder %v171, 0
    %v173 = vsel %vm172, 1, 0
    %vm174 = vcmp.eq.s32.totalorder %v173, 1
    %v175 = vsel %vm174, %v156, %v164
    %v176 = vsel %vm174, %v158, %v166
    %v177 = vsel %vm174, %v160, %v168
    %v178 = vsel %vm174, %v162, %v170
    %179 = vrot.lane.b32.xlu0 %v175, 64
    %v180 = vpop.permute.xlu0 %179
    %181 = vrot.lane.b32.xlu0 %v176, 64
    %v182 = vpop.permute.xlu0 %181
    %183 = vrot.lane.b32.xlu0 %v177, 64
    %v184 = vpop.permute.xlu0 %183
    %185 = vrot.lane.b32.xlu0 %v178, 64
    %v186 = vpop.permute.xlu0 %185
    %187 = vst [vmem:[#allocation5] sm:$0xff] %v180
    %188 = vst [vmem:[#allocation5 + $0x10] sm:$0xff] %v182
    %189 = vst [vmem:[#allocation5 + $0x20] sm:$0xff] %v184
    %190 = vst [vmem:[#allocation5 + $0x30] sm:$0xff] %v186
    %v191 = vld [vmem:[#allocation2] sm:$0xff]
    %v192 = vld [vmem:[#allocation2 + $0x10] sm:$0xff]
    %v193 = vld [vmem:[#allocation2 + $0x20] sm:$0xff]
    %v194 = vld [vmem:[#allocation2 + $0x30] sm:$0xff]
    %195 = vrot.lane.b32.xlu0 %v191, 127
    %v196 = vpop.permute.xlu0 %195
    %197 = vrot.lane.b32.xlu0 %v192, 127
    %v198 = vpop.permute.xlu0 %197
    %199 = vrot.lane.b32.xlu0 %v193, 127
    %v200 = vpop.permute.xlu0 %199
    %201 = vrot.lane.b32.xlu0 %v194, 127
    %v202 = vpop.permute.xlu0 %201
    %203 = vrot.lane.b32.xlu0 %v191, 1
    %v204 = vpop.permute.xlu0 %203
    %205 = vrot.lane.b32.xlu0 %v192, 1
    %v206 = vpop.permute.xlu0 %205
    %207 = vrot.lane.b32.xlu0 %v193, 1
    %v208 = vpop.permute.xlu0 %207
    %209 = vrot.lane.b32.xlu0 %v194, 1
    %v210 = vpop.permute.xlu0 %209
    %v211 = vsel %vm54, %v196, %v204
    %v212 = vsel %vm54, %v198, %v206
    %v213 = vsel %vm54, %v200, %v208
    %v214 = vsel %vm54, %v202, %v210
    %215 = vrot.lane.b32.xlu0 %v211, 126
    %v216 = vpop.permute.xlu0 %215
    %217 = vrot.lane.b32.xlu0 %v212, 126
    %v218 = vpop.permute.xlu0 %217
    %219 = vrot.lane.b32.xlu0 %v213, 126
    %v220 = vpop.permute.xlu0 %219
    %221 = vrot.lane.b32.xlu0 %v214, 126
    %v222 = vpop.permute.xlu0 %221
    %223 = vrot.lane.b32.xlu0 %v211, 2
    %v224 = vpop.permute.xlu0 %223
    %225 = vrot.lane.b32.xlu0 %v212, 2
    %v226 = vpop.permute.xlu0 %225
    %227 = vrot.lane.b32.xlu0 %v213, 2
    %v228 = vpop.permute.xlu0 %227
    %229 = vrot.lane.b32.xlu0 %v214, 2
    %v230 = vpop.permute.xlu0 %229
    %v231 = vsel %vm78, %v216, %v224
    %v232 = vsel %vm78, %v218, %v226
    %v233 = vsel %vm78, %v220, %v228
    %v234 = vsel %vm78, %v222, %v230
    %235 = vrot.lane.b32.xlu0 %v231, 124
    %v236 = vpop.permute.xlu0 %235
    %237 = vrot.lane.b32.xlu0 %v232, 124
    %v238 = vpop.permute.xlu0 %237
    %239 = vrot.lane.b32.xlu0 %v233, 124
    %v240 = vpop.permute.xlu0 %239
    %241 = vrot.lane.b32.xlu0 %v234, 124
    %v242 = vpop.permute.xlu0 %241
    %243 = vrot.lane.b32.xlu0 %v231, 4
    %v244 = vpop.permute.xlu0 %243
    %245 = vrot.lane.b32.xlu0 %v232, 4
    %v246 = vpop.permute.xlu0 %245
    %247 = vrot.lane.b32.xlu0 %v233, 4
    %v248 = vpop.permute.xlu0 %247
    %249 = vrot.lane.b32.xlu0 %v234, 4
    %v250 = vpop.permute.xlu0 %249
    %v251 = vsel %vm102, %v236, %v244
    %v252 = vsel %vm102, %v238, %v246
    %v253 = vsel %vm102, %v240, %v248
    %v254 = vsel %vm102, %v242, %v250
    %255 = vrot.lane.b32.xlu0 %v251, 120
    %v256 = vpop.permute.xlu0 %255
    %257 = vrot.lane.b32.xlu0 %v252, 120
    %v258 = vpop.permute.xlu0 %257
    %259 = vrot.lane.b32.xlu0 %v253, 120
    %v260 = vpop.permute.xlu0 %259
    %261 = vrot.lane.b32.xlu0 %v254, 120
    %v262 = vpop.permute.xlu0 %261
    %263 = vrot.lane.b32.xlu0 %v251, 8
    %v264 = vpop.permute.xlu0 %263
    %265 = vrot.lane.b32.xlu0 %v252, 8
    %v266 = vpop.permute.xlu0 %265
    %267 = vrot.lane.b32.xlu0 %v253, 8
    %v268 = vpop.permute.xlu0 %267
    %269 = vrot.lane.b32.xlu0 %v254, 8
    %v270 = vpop.permute.xlu0 %269
    %v271 = vsel %vm126, %v256, %v264
    %v272 = vsel %vm126, %v258, %v266
    %v273 = vsel %vm126, %v260, %v268
    %v274 = vsel %vm126, %v262, %v270
    %275 = vrot.lane.b32.xlu0 %v271, 112
    %v276 = vpop.permute.xlu0 %275
    %277 = vrot.lane.b32.xlu0 %v272, 112
    %v278 = vpop.permute.xlu0 %277
    %279 = vrot.lane.b32.xlu0 %v273, 112
    %v280 = vpop.permute.xlu0 %279
    %281 = vrot.lane.b32.xlu0 %v274, 112
    %v282 = vpop.permute.xlu0 %281
    %283 = vrot.lane.b32.xlu0 %v271, 16
    %v284 = vpop.permute.xlu0 %283
    %285 = vrot.lane.b32.xlu0 %v272, 16
    %v286 = vpop.permute.xlu0 %285
    %287 = vrot.lane.b32.xlu0 %v273, 16
    %v288 = vpop.permute.xlu0 %287
    %289 = vrot.lane.b32.xlu0 %v274, 16
    %v290 = vpop.permute.xlu0 %289
    %v291 = vsel %vm150, %v276, %v284
    %v292 = vsel %vm150, %v278, %v286
    %v293 = vsel %vm150, %v280, %v288
    %v294 = vsel %vm150, %v282, %v290
    %295 = vrot.lane.b32.xlu0 %v291, 96
    %v296 = vpop.permute.xlu0 %295
    %297 = vrot.lane.b32.xlu0 %v292, 96
    %v298 = vpop.permute.xlu0 %297
    %299 = vrot.lane.b32.xlu0 %v293, 96
    %v300 = vpop.permute.xlu0 %299
    %301 = vrot.lane.b32.xlu0 %v294, 96
    %v302 = vpop.permute.xlu0 %301
    %303 = vrot.lane.b32.xlu0 %v291, 32
    %v304 = vpop.permute.xlu0 %303
    %305 = vrot.lane.b32.xlu0 %v292, 32
    %v306 = vpop.permute.xlu0 %305
    %307 = vrot.lane.b32.xlu0 %v293, 32
    %v308 = vpop.permute.xlu0 %307
    %309 = vrot.lane.b32.xlu0 %v294, 32
    %v310 = vpop.permute.xlu0 %309
    %v311 = vsel %vm174, %v296, %v304
    %v312 = vsel %vm174, %v298, %v306
    %v313 = vsel %vm174, %v300, %v308
    %v314 = vsel %vm174, %v302, %v310
    %315 = vrot.lane.b32.xlu0 %v311, 64
    %v316 = vpop.permute.xlu0 %315
    %317 = vrot.lane.b32.xlu0 %v312, 64
    %v318 = vpop.permute.xlu0 %317
    %319 = vrot.lane.b32.xlu0 %v313, 64
    %v320 = vpop.permute.xlu0 %319
    %321 = vrot.lane.b32.xlu0 %v314, 64
    %v322 = vpop.permute.xlu0 %321
    %323 = vst [vmem:[#allocation5 + $0x8] sm:$0xff] %v316
    %324 = vst [vmem:[#allocation5 + $0x18] sm:$0xff] %v318
    %325 = vst [vmem:[#allocation5 + $0x28] sm:$0xff] %v320
    %326 = vst [vmem:[#allocation5 + $0x38] sm:$0xff] %v322
    // Predicated region
    $region10: #{tpu_custom_call.1} parent=1 // pred_check
      _
    $region11: #{tpu_custom_call.1} parent=1 // pred_check_branch
      %328 = sbr.rel (0) target = $region13
    $region12: #{tpu_custom_call.1} parent=1 // pred_region
      %s330 = ssub.s32 1024, 1024
      %331 = vsyncadd [#allocation4], %s330
      %s332 = sshll.u32 [#allocation5], 4
      %s333 = int_to_ptr.vmem [resolvable:$true] %s332
      %338 = dma.vmem_to_hbm [thread:$0]  %s333, 1024, %s1, [#allocation4], 256, 256, 16
    $region13: #{tpu_custom_call.1} parent=1 // pred_fallthru
      _
    // Predicated region
    $region14: #{tpu_custom_call.1} parent=1 // pred_check
      _
    $region15: #{tpu_custom_call.1} parent=1 // pred_check_branch
      %340 = sbr.rel (0) target = $region17
    $region16: #{tpu_custom_call.1} parent=1 // pred_region
      %341 = dma.done [#allocation4], 1024
    $region17: #{tpu_custom_call.1} parent=1 // pred_fallthru
      _
    %342 = vsyncpa [#allocation3], 1
    %343 = vsyncpa [#allocation4], 1

</llo_original>
